<compile_context>
chip_gen: v7x
topology: tpu7x:2x2x1
jax: 0.10.0
libtpu: 0.0.40
codegen_flags: <defaults>
</compile_context>

<pallas_src>
import functools

import jax
import jax.numpy as jnp
from jax.experimental import pallas as pl
from jax.experimental.pallas import tpu as pltpu

_MIB = 1024 * 1024


def _round_up(x, m):
    return ((x + m - 1) // m) * m


def _scoped_vmem_cap_bytes():
    """Conservative per-generation VMEM cap for the kernel's working set."""
    try:
        phys = int(pltpu.get_tpu_info().vmem_capacity_bytes)
        # Use at most half of physical VMEM (v5e/v6e: 128 MiB -> 64, v7x: 64 -> 32).
        return min(phys // 2, 64 * _MIB)
    except Exception:
        return 32 * _MIB  # safe on v5e / v6e / v7x


def _mlp_readout_kernel(x_ref, w1_ref, b1_ref, out_ref, *,
                        n_rows, tile_n, tiles_per_core, needs_mask):
    # x_ref: (tile_n, D)   w1_ref: (D, H)   b1_ref: (1, H) f32
    # out_ref: (1, 1, H) f32  -- resident partial row-sum accumulator per core.
    c = pl.program_id(0)
    i = pl.program_id(1)

    @pl.when(i == 0)
    def _init():
        out_ref[...] = jnp.zeros_like(out_ref)

    # Linear1 + ReLU on this tile of rows (MXU matmul, f32 accumulation).
    h = jnp.dot(x_ref[...], w1_ref[...], preferred_element_type=jnp.float32)
    h = jnp.maximum(h + b1_ref[...], 0.0)                       # (tile_n, H)

    # Mask rows past N (partial last tile and/or clamped extra tiles), so they
    # neither contribute ReLU(b1) nor leak garbage/stale VMEM data.
    if needs_mask:
        row0 = (c * tiles_per_core + i) * tile_n
        row = row0 + jax.lax.broadcasted_iota(jnp.int32, (tile_n, 1), 0)
        h = jnp.where(row < n_rows, h, 0.0)

    # Accumulate the row-sum of h; Linear2 is applied to the sum (linearity).
    out_ref[...] += jnp.sum(h, axis=0).reshape(1, 1, -1)


def mlp_readout(x, w1, b1, w2, b2, *, tile_n=None, num_cores=2,
                target_tile_bytes=4 * _MIB):
    """x: (B, N, D); w1: (D, H); b1: (H,); w2: (H, 2); b2: (2,).

    Matches MLPreadout.forward: softmax(sum_n Linear2(ReLU(Linear1(x[0])))).
    Weights are stored pre-transposed ((in, out)) relative to torch's Linear.
    x may be float32 or bfloat16 (bf16 halves the HBM traffic; f32 accumulate).
    """
    B, N, D = x.shape
    H = w1.shape[1]

    # bf16 activations -> bf16 W1 so the MXU runs its native path (f32 acc).
    w1 = w1.astype(x.dtype)
    x_isz = int(x.dtype.itemsize)
    w_isz = int(w1.dtype.itemsize)

    d_pad = _round_up(D, 128)
    h_pad = _round_up(H, 128)
    vmem_cap = _scoped_vmem_cap_bytes()

    def vmem_needed(t):
        x_buf = 2 * t * d_pad * x_isz                     # double-buffered x tile
        w_buf = 2 * _round_up(D, 8) * h_pad * w_isz       # W1 (budgeted 2x)
        b_buf = 2 * 8 * h_pad * 4                         # b1
        h_buf = t * h_pad * 4                             # f32 h intermediate
        o_buf = 2 * 8 * h_pad * 4                         # output block
        return x_buf + w_buf + b_buf + h_buf + o_buf

    # --- tile sizing by bytes (lane-padded), clamped to the VMEM budget ---
    if tile_n is None:
        rows = max(8, int(target_tile_bytes) // (d_pad * x_isz))
        tile_n = min(rows, N)
    else:
        tile_n = int(min(tile_n, N))
    if tile_n < N:
        tile_n = max(8, (tile_n // 8) * 8)    # sublane quantum unless full N
    while tile_n > 8 and tile_n < N and vmem_needed(tile_n) > vmem_cap:
        tile_n = max(8, ((tile_n // 2) // 8) * 8)
    if tile_n == N:
        # Single tile covers all rows; still make sure it fits.
        while tile_n > 8 and vmem_needed(tile_n) > vmem_cap:
            tile_n = max(8, ((tile_n // 2) // 8) * 8)

    total_tiles = pl.cdiv(N, tile_n)
    n_cores = max(1, min(int(num_cores), total_tiles))
    tiles_per_core = pl.cdiv(total_tiles, n_cores)
    needs_mask = (n_cores * tiles_per_core * tile_n != N)

    vmem_limit = int(min(vmem_cap, vmem_needed(tile_n) + 4 * _MIB))
    vmem_limit = max(vmem_limit, 16 * _MIB)

    b1_2d = b1.reshape(1, H).astype(jnp.float32)

    kernel = functools.partial(
        _mlp_readout_kernel, n_rows=N, tile_n=tile_n,
        tiles_per_core=tiles_per_core, needs_mask=needs_mask)

    def x_index_map(c, i):
        # Clamp so the rectangular (cores, tiles_per_core) grid never requests
        # an out-of-range block; extra blocks are fully masked in the kernel.
        b = c * tiles_per_core + i
        return (0, jnp.minimum(b, total_tiles - 1), 0)

    cost = pl.CostEstimate(
        flops=2 * N * D * H + 3 * N * H,
        transcendentals=0,
        bytes_accessed=(x_isz * N * D + w_isz * D * H + 4 * H
                        + 4 * n_cores * H),
    )

    partial_hsum = pl.pallas_call(
        kernel,
        out_shape=jax.ShapeDtypeStruct((n_cores, 1, H), jnp.float32),
        grid_spec=pltpu.PrefetchScalarGridSpec(
            num_scalar_prefetch=0,
            grid=(n_cores, tiles_per_core),
            in_specs=[
                # Only batch 0 of x is ever DMA'd (Squeezed leading dim).
                pl.BlockSpec((pl.Squeezed(), tile_n, D), x_index_map),
                pl.BlockSpec((D, H), lambda c, i: (0, 0)),
                pl.BlockSpec((1, H), lambda c, i: (0, 0)),
            ],
            out_specs=pl.BlockSpec((1, 1, H), lambda c, i: (c, 0, 0)),
        ),
        compiler_params=pltpu.CompilerParams(
            # Leading axis splits the N reduction across TensorCores (v7x);
            # trailing axis is the in-core reduction with a resident accumulator.
            dimension_semantics=("parallel", "arbitrary"),
            vmem_limit_bytes=vmem_limit,
        ),
        cost_estimate=cost,
    )(x, w1, b1_2d)

    # Tiny O(H) epilogue in plain JAX (per perf review): Linear2 applied to the
    # row-sum (exact by linearity), plus the stable 2-way softmax.
    hsum = jnp.sum(partial_hsum, axis=(0, 1)).astype(jnp.float32)       # (H,)
    s = hsum @ w2.astype(jnp.float32) + jnp.float32(N) * b2.astype(jnp.float32)
    return jax.nn.softmax(s)


def _reference(x, w1, b1, w2, b2):
    h = jnp.maximum(x[0].astype(jnp.float32) @ w1.astype(jnp.float32) + b1, 0.0)
    logits = h @ w2 + b2
    return jax.nn.softmax(jnp.sum(logits, axis=0))


if __name__ == "__main__":
    # Small shapes consistent with the module: embed_dim=32 -> hidden=8 -> out=2.
    B, N, D = 2, 20, 32
    H = D // 4

    key = jax.random.PRNGKey(0)
    kx, k1, kb1, k2, kb2 = jax.random.split(key, 5)

    x = jax.random.normal(kx, (B, N, D), dtype=jnp.float32)

    # Deterministic synthetic parameters (PyTorch-style uniform fan-in init).
    bound1 = 1.0 / jnp.sqrt(D)
    w1 = jax.random.uniform(k1, (D, H), minval=-bound1, maxval=bound1,
                            dtype=jnp.float32)
    b1 = jax.random.uniform(kb1, (H,), minval=-bound1, maxval=bound1,
                            dtype=jnp.float32)
    bound2 = 1.0 / jnp.sqrt(H)
    w2 = jax.random.uniform(k2, (H, 2), minval=-bound2, maxval=bound2,
                            dtype=jnp.float32)
    b2 = jax.random.uniform(kb2, (2,), minval=-bound2, maxval=bound2,
                            dtype=jnp.float32)

    # 1) Default byte-sized tile: one tile covers all N rows, single core.
    out = jax.block_until_ready(mlp_readout(x, w1, b1, w2, b2))
    ref = _reference(x, w1, b1, w2, b2)
    assert out.shape == (2,)
    assert jnp.allclose(out, ref, atol=1e-5, rtol=1e-5), (out, ref)

    # 2) Forced small tiles + 2-core split: N=20, tile=8 -> 3 tiles over a
    #    (2, 2) grid; exercises partial-tile masking AND the clamped extra tile.
    out2 = jax.block_until_ready(
        mlp_readout(x, w1, b1, w2, b2, tile_n=8, num_cores=2))
    assert jnp.allclose(out2, ref, atol=1e-5, rtol=1e-5), (out2, ref)

    # 3) N=12, tile=8, 2 cores: one full tile per core-half, second one partial.
    x12 = x[:, :12, :]
    out3 = jax.block_until_ready(
        mlp_readout(x12, w1, b1, w2, b2, tile_n=8, num_cores=2))
    ref3 = _reference(x12, w1, b1, w2, b2)
    assert jnp.allclose(out3, ref3, atol=1e-5, rtol=1e-5), (out3, ref3)

    # 4) bf16 activations: halves HBM traffic; MXU bf16 path with f32 accumulate.
    xb = x.astype(jnp.bfloat16)
    outb = jax.block_until_ready(mlp_readout(xb, w1, b1, w2, b2))
    hb = jnp.maximum(
        xb[0].astype(jnp.float32)
        @ w1.astype(jnp.bfloat16).astype(jnp.float32) + b1, 0.0)
    refb = jax.nn.softmax(jnp.sum(hb @ w2 + b2, axis=0))
    assert jnp.allclose(outb, refb, atol=2e-2, rtol=2e-2), (outb, refb)

    print("KERNEL_OK")
</pallas_src>

<mosaic_0001>
module attributes {stable_mosaic.version = 11 : i64} {
  func.func @_mlp_readout_kernel(%arg0: i32, %arg1: i32, %arg2: memref<1x20x32xf32, #tpu.memory_space<vmem>>, %arg3: memref<32x8xf32, #tpu.memory_space<vmem>>, %arg4: memref<1x8xf32, #tpu.memory_space<vmem>>, %arg5: memref<1x1x8xf32, #tpu.memory_space<vmem>>) attributes {dimension_semantics = [#tpu.dimension_semantics<parallel>, #tpu.dimension_semantics<arbitrary>], iteration_bounds = array<i64: 1, 1>, scalar_prefetch = 0 : i64, scratch_operands = 0 : i64, tpu.core_type = #tpu.core_type<tc>, window_params = [{transform_indices = @transform_0, window_bounds = array<i64: 1, 20, 32>}, {pipeline_mode = #tpu.pipeline_mode<synchronous>, transform_indices = @transform_1, window_bounds = array<i64: 32, 8>}, {pipeline_mode = #tpu.pipeline_mode<synchronous>, transform_indices = @transform_2, window_bounds = array<i64: 1, 8>}, {transform_indices = @transform_3, window_bounds = array<i64: 1, 1, 8>}]} {
    %c0_i32 = arith.constant 0 : i32
    %0 = arith.cmpi eq, %arg1, %c0_i32 : i32
    %1 = arith.extui %0 : i1 to i32
    %c0_i32_0 = arith.constant 0 : i32
    %2 = arith.cmpi ne, %1, %c0_i32_0 : i32
    scf.if %2 {
      %cst_15 = arith.constant 0.000000e+00 : f32
      %17 = vector.broadcast %cst_15 : f32 to vector<1x1x8xf32>
      %c0_16 = arith.constant 0 : index
      %c0_17 = arith.constant 0 : index
      %c0_18 = arith.constant 0 : index
      %18 = vector.load %arg5[%c0_16, %c0_17, %c0_18] : memref<1x1x8xf32, #tpu.memory_space<vmem>>, vector<1x1x8xf32>
      tpu.vector_store %arg5[%c0_16, %c0_17, %c0_18], %17 {strides = array<i32>} : memref<1x1x8xf32, #tpu.memory_space<vmem>>, vector<1x1x8xf32>,
    } else {
    }
    %c0 = arith.constant 0 : index
    %c0_1 = arith.constant 0 : index
    %c0_2 = arith.constant 0 : index
    %3 = vector.load %arg2[%c0, %c0_1, %c0_2] : memref<1x20x32xf32, #tpu.memory_space<vmem>>, vector<1x20x32xf32>
    %4 = vector.shape_cast %3 : vector<1x20x32xf32> to vector<20x32xf32>
    %c0_3 = arith.constant 0 : index
    %c0_4 = arith.constant 0 : index
    %5 = vector.load %arg3[%c0_3, %c0_4] : memref<32x8xf32, #tpu.memory_space<vmem>>, vector<32x8xf32>
    %cst = arith.constant dense<0.000000e+00> : vector<20x8xf32>
    %6 = tpu.matmul %4, %5, %cst {dimension_numbers = #tpu.dot_dimension_numbers<[1], [0], [0], [1], [0, 0, 1, 1], [], []>} : vector<20x32xf32>, vector<32x8xf32>, vector<20x8xf32> -> vector<20x8xf32>
    %c0_5 = arith.constant 0 : index
    %c0_6 = arith.constant 0 : index
    %7 = vector.load %arg4[%c0_5, %c0_6] : memref<1x8xf32, #tpu.memory_space<vmem>>, vector<1x8xf32>
    %8 = vector.broadcast %7 : vector<1x8xf32> to vector<20x8xf32>
    %9 = arith.addf %6, %8 : vector<20x8xf32>
    %cst_7 = arith.constant 0.000000e+00 : f32
    %10 = vector.broadcast %cst_7 : f32 to vector<20x8xf32>
    %11 = arith.maximumf %9, %10 : vector<20x8xf32>
    %c0_8 = arith.constant 0 : index
    %c0_9 = arith.constant 0 : index
    %c0_10 = arith.constant 0 : index
    %12 = vector.load %arg5[%c0_8, %c0_9, %c0_10] : memref<1x1x8xf32, #tpu.memory_space<vmem>>, vector<1x1x8xf32>
    %cst_11 = arith.constant dense<0.000000e+00> : vector<8xf32>
    %13 = vector.multi_reduction <add>, %11, %cst_11 [0] : vector<20x8xf32> to vector<8xf32>
    %14 = vector.shape_cast %13 : vector<8xf32> to vector<1x1x8xf32>
    %15 = arith.addf %12, %14 : vector<1x1x8xf32>
    %c0_12 = arith.constant 0 : index
    %c0_13 = arith.constant 0 : index
    %c0_14 = arith.constant 0 : index
    %16 = vector.load %arg5[%c0_12, %c0_13, %c0_14] : memref<1x1x8xf32, #tpu.memory_space<vmem>>, vector<1x1x8xf32>
    tpu.vector_store %arg5[%c0_12, %c0_13, %c0_14], %15 {strides = array<i32>} : memref<1x1x8xf32, #tpu.memory_space<vmem>>, vector<1x1x8xf32>,
    return
  }
  func.func @transform_0(%arg0: i32, %arg1: i32) -> (i32, i32, i32) {
    %c1_i32 = arith.constant 1 : i32
    %0 = arith.muli %arg0, %c1_i32 : i32
    %1 = arith.addi %0, %arg1 : i32
    %c0_i32 = arith.constant 0 : i32
    %2 = arith.minsi %1, %c0_i32 : i32
    %c0_i32_0 = arith.constant 0 : i32
    %c0_i32_1 = arith.constant 0 : i32
    %c0_i32_2 = arith.constant 0 : i32
    return %c0_i32_0, %2, %c0_i32_1 : i32, i32, i32
  }
  func.func @transform_1(%arg0: i32, %arg1: i32) -> (i32, i32) {
    %c0_i32 = arith.constant 0 : i32
    %c0_i32_0 = arith.constant 0 : i32
    %c0_i32_1 = arith.constant 0 : i32
    return %c0_i32, %c0_i32_0 : i32, i32
  }
  func.func @transform_2(%arg0: i32, %arg1: i32) -> (i32, i32) {
    %c0_i32 = arith.constant 0 : i32
    %c0_i32_0 = arith.constant 0 : i32
    %c0_i32_1 = arith.constant 0 : i32
    return %c0_i32, %c0_i32_0 : i32, i32
  }
  func.func @transform_3(%arg0: i32, %arg1: i32) -> (i32, i32, i32) {
    %c0_i32 = arith.constant 0 : i32
    %c0_i32_0 = arith.constant 0 : i32
    %c0_i32_1 = arith.constant 0 : i32
    return %arg0, %c0_i32, %c0_i32_0 : i32, i32, i32
  }
}

</mosaic_0001>

<llo_original>
// kernel: tpu_custom_call.1
$region0: #{tpu_custom_call.1}
  #allocation0 [shape = 'u32[]', space=smem, size = 0x4, offset = 0x4, fixed_abs, tag = 'smem constant byte address 0x4 - core index']
  #allocation1 [shape = 'u32[144,128]{1,0:T(1,128)}', space=vmem, size = 0x12000, scoped, tag = 'internal scratch']
  %s0 = inlined_call_operand.vmem [shape: f32[2,20,32], index: 0, kind: input, shape index: {}]
  %s1 = inlined_call_operand.vmem [shape: f32[32,8], index: 1, kind: input, shape index: {}]
  %s2 = inlined_call_operand.vmem [shape: f32[1,8], index: 2, kind: input, shape index: {}]
  %s3 = inlined_call_operand.hbm [shape: f32[1,1,8], index: 3, kind: output, shape index: {}]
  %s4 = sld [smem:[#allocation0]]
  $region26: #{tpu_custom_call.1} parent=0
    _
  %s6 = ssub.s32 1, %s4
  %s7 = scalar_select 0, %s6, %s4
  $region1: #{tpu_custom_call.1} parent=0
    #allocation2 [shape = 'u8[512]{0}', space=vmem, size = 0x400, scoped, tag = 'output window, operand 0, single buffered']
    #allocation3 [shape = 's32[1]{0}', space=sflag, size = 0x4, scoped, tag = 'scoped memory for tpu_custom_call.1']
    %8 = vsyncpa [#allocation3], 0
    // Predicated region
    $region2: #{tpu_custom_call.1} parent=1 // pred_check
      _
    $region3: #{tpu_custom_call.1} parent=1 // pred_check_branch
      %10 = sbr.rel (0) target = $region5
    $region4: #{tpu_custom_call.1} parent=1 // pred_region
      %s11 = sadd.s32 0, 0
      %p12 = scmp.lt.s32.totalorder %s11, 0
      %s13 = scalar_select %p12, %s11, 0
      %s14 = smul.u32 3, %s13
      %p15 = scmp.lt.s32.totalorder %s14, 2
      %s16 = scalar_select %p15, %s14, 2
      %s17 = smul.addr %s16, 8
      %s18 = scalar_lea.vmem %s0, %s17
      %s19 = sadd.s32 0, 0
      %p20 = scmp.lt.s32.totalorder %s19, 0
      %s21 = scalar_select %p20, %s19, 0
      %s22 = smul.u32 3, %s21
    $region5: #{tpu_custom_call.1} parent=1 // pred_fallthru
      _
    // Predicated region
    $region6: #{tpu_custom_call.1} parent=1 // pred_check
      _
    $region7: #{tpu_custom_call.1} parent=1 // pred_check_branch
      %24 = sbr.rel (0) target = $region9
    $region8: #{tpu_custom_call.1} parent=1 // pred_region
      _
    $region9: #{tpu_custom_call.1} parent=1 // pred_fallthru
      _
    // Predicated region
    $region10: #{tpu_custom_call.1} parent=1 // pred_check
      _
    $region11: #{tpu_custom_call.1} parent=1 // pred_check_branch
      %26 = sbr.rel (0) target = $region13
    $region12: #{tpu_custom_call.1} parent=1 // pred_region
      _
    $region13: #{tpu_custom_call.1} parent=1 // pred_fallthru
      _
    %s27 = sadd.s32 0, 0
    %p28 = scmp.lt.s32.totalorder %s27, 0
    %s29 = scalar_select %p28, %s27, 0
    %s30 = smul.u32 3, %s29
    %p31 = scmp.lt.s32.totalorder %s30, 2
    %s32 = scalar_select %p31, %s30, 2
    %s33 = smul.addr %s32, 8
    %s34 = scalar_lea.vmem %s0, %s33
    %s35 = sadd.s32 0, 0
    %p36 = scmp.lt.s32.totalorder %s35, 0
    %s37 = scalar_select %p36, %s35, 0
    %s38 = smul.u32 3, %s37
    %p39 = scmp.lt.s32.totalorder %s38, 2
    %s40 = scalar_select %p39, %s38, 2
    %s41 = smul.addr %s40, 8
    %s42 = scalar_lea.vmem %s0, %s41
    %s43 = sadd.s32 0, 0
    %p44 = scmp.lt.s32.totalorder %s43, 0
    %s45 = scalar_select %p44, %s43, 0
    %s46 = smul.u32 3, %s45
    %p47 = scmp.eq.s32.totalorder 0, 0
    // Predicated region
    $region14: #{tpu_custom_call.1} parent=1 // pred_check
      %p48 = pneg %p47
    $region15: #{tpu_custom_call.1} parent=1 // pred_check_branch
      %50 = sbr.rel (%p48) target = $region17
    $region16: #{tpu_custom_call.1} parent=1 // pred_region
      %vm51 = vcmask 57344
      %52 = vst.msk [vmem:[#allocation2] sm:$0x1] %vm51, 0.0
    $region17: #{tpu_custom_call.1} parent=1 // pred_fallthru
      _
    %v53 = vld [vmem:[%s42] sm:$0xff]
    %v54 = vld [vmem:[%s42 + $0x8] sm:$0xff]
    %v55 = vld [vmem:[%s42 + $0x10] sm:$0xf]
    %v56 = vld [vmem:[%s1] sm:$0xff]
    %v57 = vld [vmem:[%s1 + $0x8] sm:$0xff]
    %v58 = vld [vmem:[%s1 + $0x10] sm:$0xff]
    %v59 = vld [vmem:[%s1 + $0x18] sm:$0xff]
    %v60 = vld [vmem:[%s2] sm:$0x1]
    %v62 = vlaneseq
    %v63 = vshrl.u32 %v62, 7
    %v64 = vsub.s32 0, %v63
    %v65 = vrot.slane %v60, %v64
    %vm67 = vcmask 261120
    %v69 = vsel %vm67, %v53, 0
    %v72 = vsel %vm67, %v54, 0
    %v75 = vsel %vm67, %v55, 0
    %77 = vmatprep.subr.mxu0 0.0
    %78 = vmatpush1.msra.mxu0 %v56
    %79 = vmatprep.subr.mxu0 0.0
    %80 = vmatpush1.msra.mxu0 %v57
    %81 = vmatprep.subr.mxu0 0.0
    %82 = vmatpush1.msra.mxu0 %v58
    %83 = vmatprep.subr.mxu0 0.0
    %84 = vmatpush1.msra.mxu0 %v59
    %85 = vmatprep.subr.mxu0 0.0
    %86 = vmatpush1.msra.mxu0 0.0
    %87 = vmatprep.subr.mxu0 0.0
    %88 = vmatpush1.msra.mxu0 0.0
    %89 = vmatprep.subr.mxu0 0.0
    %90 = vmatpush1.msra.mxu0 0.0
    %91 = vmatprep.subr.mxu0 0.0
    %92 = vmatpush1.msra.mxu0 0.0
    %93 = vmatprep.subr.mxu0 0.0
    %94 = vmatpush1.msra.mxu0 0.0
    %95 = vmatprep.subr.mxu0 0.0
    %96 = vmatpush1.msra.mxu0 0.0
    %97 = vmatprep.subr.mxu0 0.0
    %98 = vmatpush1.msra.mxu0 0.0
    %99 = vmatprep.subr.mxu0 0.0
    %100 = vmatpush1.msra.mxu0 0.0
    %101 = vmatprep.subr.mxu0 0.0
    %102 = vmatpush1.msra.mxu0 0.0
    %103 = vmatprep.subr.mxu0 0.0
    %104 = vmatpush1.msra.mxu0 0.0
    %105 = vmatprep.subr.mxu0 0.0
    %106 = vmatpush1.msra.mxu0 0.0
    %107 = vmatprep.subr.mxu0 0.0
    %108 = vmatpush1.msra.mxu0 0.0
    %109 = vmatprep.subr.mxu0 0.0
    %110 = vmatpush1.msra.mxu0 0.0
    %111 = vmatprep.subr.mxu0 0.0
    %112 = vmatpush1.msra.mxu0 0.0
    %113 = vmatprep.subr.mxu0 0.0
    %114 = vmatpush1.msra.mxu0 0.0
    %115 = vmatprep.subr.mxu0 0.0
    %116 = vmatpush1.msra.mxu0 0.0
    %117 = vmatprep.subr.mxu0 0.0
    %118 = vmatpush1.msra.mxu0 0.0
    %119 = vmatprep.subr.mxu0 0.0
    %120 = vmatpush1.msra.mxu0 0.0
    %121 = vmatprep.subr.mxu0 0.0
    %122 = vmatpush1.msra.mxu0 0.0
    %123 = vmatprep.subr.mxu0 0.0
    %124 = vmatpush1.msra.mxu0 0.0
    %125 = vmatprep.subr.mxu0 0.0
    %126 = vmatpush1.msra.mxu0 0.0
    %127 = vmatprep.subr.mxu0 0.0
    %128 = vmatpush1.msra.mxu0 0.0
    %129 = vmatprep.subr.mxu0 0.0
    %130 = vmatpush1.msra.mxu0 0.0
    %131 = vmatprep.subr.mxu0 0.0
    %132 = vmatpush1.msra.mxu0 0.0
    %133 = vmatprep.subr.mxu0 0.0
    %134 = vmatpush1.msra.mxu0 0.0
    %135 = vmatprep.subr.mxu0 0.0
    %136 = vmatpush1.msra.mxu0 0.0
    %137 = vmatprep.subr.mxu0 0.0
    %138 = vmatpush1.msra.mxu0 0.0
    %139 = vmatprep.subr.mxu0 0.0
    %140 = vmatpush1.msra.mxu0 0.0
    %141 = vmatprep.mubr.f32.mxu0 0.0
    %142 = vmatmul.mubr.f32.gmra.mrb[0].mxu0 %v69
    %v143 = vpop.f32.mrb[0].mxu0
    %v144 = vadd.f32 %v65, %v143
    %v145 = vpop.f32.mrb[0].mxu0
    %146 = vmatprep.mubr.f32.mxu0 0.0
    %147 = vmatmul.mubr.f32.gmra.mrb[0].mxu0 %v72
    %v148 = vpop.f32.mrb[0].mxu0
    %v149 = vadd.f32 %v65, %v148
    %v150 = vpop.f32.mrb[0].mxu0
    %151 = vmatprep.mubr.f32.mxu0 0.0
    %152 = vmatmul.mubr.f32.gmra.mrb[0].mxu0 %v75
    %v153 = vpop.f32.mrb[0].mxu0
    %v154 = vadd.f32 %v65, %v153
    %v155 = vpop.f32.mrb[0].mxu0
    %156 = vdwg.mxu0
    %v157 = vmax.f32 %v144, 0.0
    %v158 = vmax.f32 %v149, 0.0
    %v159 = vmax.f32 %v154, 0.0
    %v160 = vld [vmem:[#allocation2] sm:$0x1]
    %vm161 = vcmask 64512
    %v162 = vsel %vm161, %v157, 0.0
    %v163 = vsel %vm161, %v158, 0.0
    %v164 = vadd.f32 %v162, %v163
    %vm165 = vcmask 60416
    %v166 = vsel %vm165, %v159, 0.0
    %v167 = vadd.f32 %v164, %v166
    %v168 = vrot.slane %v167, 4
    %v169 = vadd.f32 %v167, %v168
    %v170 = vrot.slane %v169, 2
    %v171 = vadd.f32 %v169, %v170
    %v172 = vrot.slane %v171, 1
    %v173 = vadd.f32 %v171, %v172
    %v174 = vadd.f32 %v160, %v173
    %vm175 = vcmask 57344
    %176 = vst.msk [vmem:[#allocation2] sm:$0x1] %vm175, %v174
    // Predicated region
    $region18: #{tpu_custom_call.1} parent=1 // pred_check
      _
    $region19: #{tpu_custom_call.1} parent=1 // pred_check_branch
      %178 = sbr.rel (0) target = $region21
    $region20: #{tpu_custom_call.1} parent=1 // pred_region
      %s180 = ssub.s32 16, 16
      %181 = vsyncadd [#allocation3], %s180
      %s183 = sshll.u32 [#allocation2], 4
      %s184 = int_to_ptr.vmem [resolvable:$true] %s183
      %186 = dma.vmem_to_hbm [thread:$0]  %s184, 16, %s3, [#allocation3]
    $region21: #{tpu_custom_call.1} parent=1 // pred_fallthru
      _
    // Predicated region
    $region22: #{tpu_custom_call.1} parent=1 // pred_check
      _
    $region23: #{tpu_custom_call.1} parent=1 // pred_check_branch
      %188 = sbr.rel (0) target = $region25
    $region24: #{tpu_custom_call.1} parent=1 // pred_region
      %189 = dma.done [#allocation3], 16
    $region25: #{tpu_custom_call.1} parent=1 // pred_fallthru
      _
    %190 = vsyncpa [#allocation3], 1

</llo_original>
